<compile_context>
chip_gen: v5e
topology: v5e:2x2
jax: 0.10.0
libtpu: 0.0.40
codegen_flags: <defaults>
</compile_context>

<pallas_src>
import jax
import jax.numpy as jnp
import numpy as np
from jax.experimental import pallas as pl
from jax.experimental.pallas import tpu as pltpu


def double_conv_kernel(x_ref, a1_ref, b1_ref, a2_ref, b2_ref, out_ref):
    """One batch element per grid step.  Row-major (rows, width*channels) layout.

    x_ref  : (1, H+4, (W+4)*Cin)        bf16 input, padded by 2 in H and W
    a1_ref : (3, (W+4)*Cin, (W+2)*Cout) bf16 banded conv1 weights (BN1 scale folded)
    b1_ref : (1, (W+2)*Cout)            f32 BN1 bias tiled over width (halo lanes = 0)
    a2_ref : (3, (W+2)*Cout, W*Cout)    bf16 banded conv2 weights (BN2 scale folded)
    b2_ref : (1, W*Cout)                f32 BN2 bias tiled over width
    out_ref: (1, H, W*Cout)             f32 output (lane-dense)
    """
    _, H, WCo = out_ref.shape
    _, Hp4, _ = x_ref.shape
    Hp2 = Hp4 - 2                       # H + 2
    L1 = a1_ref.shape[2]                # (W+2)*Cout

    x2 = x_ref[0]                       # (H+4, (W+4)*Cin), bf16

    # ---- conv1 + BN1 + ReLU over the full padded (H+2)-row footprint ------------
    # Three row-offset matmuls; kw taps + channel contraction fused into a1 (deep K).
    acc1 = jnp.zeros((Hp2, L1), jnp.float32)
    for kh in range(3):
        acc1 = acc1 + jnp.dot(x2[kh:kh + Hp2, :], a1_ref[kh],
                              preferred_element_type=jnp.float32)
    act1 = jnp.maximum(acc1 + b1_ref[...], 0.0)
    # Left/right halo lanes are already exactly zero (zero weight columns and zero
    # bias lanes); zero the top/bottom halo rows so conv2 sees proper zero padding.
    row = jax.lax.broadcasted_iota(jnp.int32, (Hp2, L1), 0)
    ypad = jnp.where((row >= 1) & (row <= Hp2 - 2), act1, 0.0).astype(x2.dtype)

    # ---- conv2 + BN2 + ReLU ------------------------------------------------------
    acc2 = jnp.zeros((H, WCo), jnp.float32)
    for kh in range(3):
        acc2 = acc2 + jnp.dot(ypad[kh:kh + H, :], a2_ref[kh],
                              preferred_element_type=jnp.float32)
    out_ref[0] = jnp.maximum(acc2 + b2_ref[...], 0.0).astype(out_ref.dtype)


def _fold_bn(gamma, beta, mean, var, eps):
    scale = gamma / jnp.sqrt(var + eps)
    bias = beta - mean * scale
    return scale, bias


def _banded_weights(w_hwio, in_w, out_w, zero_out_halo):
    """Embed a 3x3 conv (kw taps + channel contraction) into block-banded matmul
    weights: A[kh, src*Ci + ci, dst*Co + co] = w_hwio[kh, src - dst, ci, co]
    for 0 <= src - dst < 3, else 0.  Returns (3, in_w*Ci, out_w*Co)."""
    _, _, Ci, Co = w_hwio.shape
    src = jnp.arange(in_w)[:, None]
    dst = jnp.arange(out_w)[None, :]
    kw = src - dst
    valid = (kw >= 0) & (kw < 3)
    if zero_out_halo:                       # zero the left/right halo output blocks
        valid = valid & (dst >= 1) & (dst <= out_w - 2)
    blocks = w_hwio[:, jnp.clip(kw, 0, 2)]  # (3, in_w, out_w, Ci, Co)
    blocks = jnp.where(valid[None, :, :, None, None], blocks, 0.0)
    return blocks.transpose(0, 1, 3, 2, 4).reshape(3, in_w * Ci, out_w * Co)


def double_conv_forward(x_nchw, w1_oihw, bn1, w2_oihw, bn2, eps=1e-5):
    """x_nchw: (N, Cin, H, W) float32. Returns (N, Cout, H, W)."""
    N, Cin, H, W = x_nchw.shape
    Cout = w1_oihw.shape[0]

    # Fold BN scale into the conv weights (eval-mode BN); only the bias remains.
    s1, t1 = _fold_bn(*bn1, eps=eps)
    s2, t2 = _fold_bn(*bn2, eps=eps)
    w1_hwio = jnp.transpose(w1_oihw * s1[:, None, None, None], (2, 3, 1, 0))
    w2_hwio = jnp.transpose(w2_oihw * s2[:, None, None, None], (2, 3, 1, 0))

    # Banded (width-flattened) matmul weights, bf16 for the MXU.
    a1 = _banded_weights(w1_hwio, W + 4, W + 2, True).astype(jnp.bfloat16)
    a2 = _banded_weights(w2_hwio, W + 2, W, False).astype(jnp.bfloat16)

    # Per-lane biases tiled across width; conv1 halo lane blocks get zero bias.
    b1 = jnp.concatenate([jnp.zeros((Cout,), jnp.float32),
                          jnp.tile(t1.astype(jnp.float32), W),
                          jnp.zeros((Cout,), jnp.float32)]).reshape(1, (W + 2) * Cout)
    b2 = jnp.tile(t2.astype(jnp.float32), W).reshape(1, W * Cout)

    # NCHW -> NHWC -> pad by 2 -> fold (W, C) into the lane axis, cast bf16.
    x_rows = jnp.pad(jnp.transpose(x_nchw, (0, 2, 3, 1)).astype(jnp.bfloat16),
                     ((0, 0), (2, 2), (2, 2), (0, 0))).reshape(N, H + 4, (W + 4) * Cin)

    out_rows = pl.pallas_call(
        double_conv_kernel,
        out_shape=jax.ShapeDtypeStruct((N, H, W * Cout), jnp.float32),
        grid_spec=pltpu.PrefetchScalarGridSpec(
            num_scalar_prefetch=0,
            grid=(N,),
            in_specs=[
                pl.BlockSpec((1, H + 4, (W + 4) * Cin), lambda n: (n, 0, 0)),
                # Weights/biases are grid-invariant (index_map -> 0): DMA'd once.
                pl.BlockSpec((3, (W + 4) * Cin, (W + 2) * Cout), lambda n: (0, 0, 0)),
                pl.BlockSpec((1, (W + 2) * Cout), lambda n: (0, 0)),
                pl.BlockSpec((3, (W + 2) * Cout, W * Cout), lambda n: (0, 0, 0)),
                pl.BlockSpec((1, W * Cout), lambda n: (0, 0)),
            ],
            out_specs=pl.BlockSpec((1, H, W * Cout), lambda n: (n, 0, 0)),
        ),
        compiler_params=pltpu.CompilerParams(dimension_semantics=("parallel",)),
    )(x_rows, a1, b1, a2, b2)

    out_nhwc = out_rows.reshape(N, H, W, Cout)
    return jnp.transpose(out_nhwc, (0, 3, 1, 2)).astype(x_nchw.dtype)


def reference_forward(x_nchw, w1_oihw, bn1, w2_oihw, bn2, eps=1e-5):
    """Pure-JAX f32 reference matching PyTorch eval-mode semantics."""
    def bn_relu(y, params):
        g, b, m, v = params
        s = g / jnp.sqrt(v + eps)
        sh = b - m * s
        return jnp.maximum(y * s.reshape(1, -1, 1, 1) + sh.reshape(1, -1, 1, 1), 0.0)

    dn = ('NCHW', 'OIHW', 'NCHW')
    y = jax.lax.conv_general_dilated(x_nchw, w1_oihw, (1, 1), ((1, 1), (1, 1)),
                                     dimension_numbers=dn)
    y = bn_relu(y, bn1)
    y = jax.lax.conv_general_dilated(y, w2_oihw, (1, 1), ((1, 1), (1, 1)),
                                     dimension_numbers=dn)
    y = bn_relu(y, bn2)
    return y


if __name__ == "__main__":
    # Small shapes consistent with the module: batch=2, in_ch=4, out_ch=8, spatial=16.
    N, Cin, Cout, H, W = 2, 4, 8, 16, 16

    key = jax.random.PRNGKey(0)
    ks = jax.random.split(key, 10)

    x = jax.random.normal(ks[0], (N, Cin, H, W), dtype=jnp.float32)

    # Deterministic synthetic parameters (Conv weights OIHW, no bias; BN affine + running stats).
    w1 = jax.random.normal(ks[1], (Cout, Cin, 3, 3), dtype=jnp.float32) * 0.2
    w2 = jax.random.normal(ks[2], (Cout, Cout, 3, 3), dtype=jnp.float32) * 0.2

    bn1 = (jax.random.uniform(ks[3], (Cout,), minval=0.5, maxval=1.5),   # gamma
           jax.random.normal(ks[4], (Cout,)) * 0.1,                       # beta
           jax.random.normal(ks[5], (Cout,)) * 0.1,                       # running_mean
           jax.random.uniform(ks[6], (Cout,), minval=0.5, maxval=1.5))    # running_var
    bn2 = (jax.random.uniform(ks[7], (Cout,), minval=0.5, maxval=1.5),
           jax.random.normal(ks[8], (Cout,)) * 0.1,
           jax.random.normal(ks[9], (Cout,)) * 0.1,
           jax.random.uniform(ks[0], (Cout,), minval=0.5, maxval=1.5))

    out = double_conv_forward(x, w1, bn1, w2, bn2)
    out = jax.block_until_ready(out)

    ref = reference_forward(x, w1, bn1, w2, bn2)
    # bf16 MXU inputs (f32 accumulation) -> loosened tolerance vs. the f32 reference.
    np.testing.assert_allclose(np.asarray(out), np.asarray(ref), rtol=5e-2, atol=1e-1)

    assert out.shape == (N, Cout, H, W)
    print("KERNEL_OK")
</pallas_src>

<mosaic_0001>
module attributes {stable_mosaic.version = 11 : i64} {
  func.func @double_conv_kernel(%arg0: i32, %arg1: memref<1x20x80xbf16, #tpu.memory_space<vmem>>, %arg2: memref<3x80x144xbf16, #tpu.memory_space<vmem>>, %arg3: memref<1x144xf32, #tpu.memory_space<vmem>>, %arg4: memref<3x144x128xbf16, #tpu.memory_space<vmem>>, %arg5: memref<1x128xf32, #tpu.memory_space<vmem>>, %arg6: memref<1x16x128xf32, #tpu.memory_space<vmem>>) attributes {dimension_semantics = [#tpu.dimension_semantics<parallel>], iteration_bounds = array<i64: 2>, scalar_prefetch = 0 : i64, scratch_operands = 0 : i64, tpu.core_type = #tpu.core_type<tc>, window_params = [{transform_indices = @transform_0, window_bounds = array<i64: 1, 20, 80>}, {pipeline_mode = #tpu.pipeline_mode<synchronous>, transform_indices = @transform_1, window_bounds = array<i64: 3, 80, 144>}, {pipeline_mode = #tpu.pipeline_mode<synchronous>, transform_indices = @transform_2, window_bounds = array<i64: 1, 144>}, {pipeline_mode = #tpu.pipeline_mode<synchronous>, transform_indices = @transform_3, window_bounds = array<i64: 3, 144, 128>}, {pipeline_mode = #tpu.pipeline_mode<synchronous>, transform_indices = @transform_4, window_bounds = array<i64: 1, 128>}, {transform_indices = @transform_5, window_bounds = array<i64: 1, 16, 128>}]} {
    %c0 = arith.constant 0 : index
    %c0_0 = arith.constant 0 : index
    %c0_1 = arith.constant 0 : index
    %0 = vector.load %arg1[%c0, %c0_0, %c0_1] : memref<1x20x80xbf16, #tpu.memory_space<vmem>>, vector<1x20x80xbf16>
    %1 = vector.shape_cast %0 : vector<1x20x80xbf16> to vector<20x80xbf16>
    %cst = arith.constant 0.000000e+00 : f32
    %2 = vector.broadcast %cst : f32 to vector<18x144xf32>
    %3 = vector.extract_strided_slice %1 {offsets = [0, 0], sizes = [18, 80], strides = [1, 1]} : vector<20x80xbf16> to vector<18x80xbf16>
    %c0_2 = arith.constant 0 : index
    %c0_3 = arith.constant 0 : index
    %c0_4 = arith.constant 0 : index
    %4 = vector.load %arg2[%c0_2, %c0_3, %c0_4] : memref<3x80x144xbf16, #tpu.memory_space<vmem>>, vector<1x80x144xbf16>
    %5 = vector.shape_cast %4 : vector<1x80x144xbf16> to vector<80x144xbf16>
    %cst_5 = arith.constant dense<0.000000e+00> : vector<18x144xf32>
    %6 = tpu.matmul %3, %5, %cst_5 {dimension_numbers = #tpu.dot_dimension_numbers<[1], [0], [0], [1], [0, 0, 1, 1], [], []>} : vector<18x80xbf16>, vector<80x144xbf16>, vector<18x144xf32> -> vector<18x144xf32>
    %7 = arith.addf %2, %6 : vector<18x144xf32>
    %8 = vector.extract_strided_slice %1 {offsets = [1, 0], sizes = [18, 80], strides = [1, 1]} : vector<20x80xbf16> to vector<18x80xbf16>
    %c1 = arith.constant 1 : index
    %c0_6 = arith.constant 0 : index
    %c0_7 = arith.constant 0 : index
    %9 = vector.load %arg2[%c1, %c0_6, %c0_7] : memref<3x80x144xbf16, #tpu.memory_space<vmem>>, vector<1x80x144xbf16>
    %10 = vector.shape_cast %9 : vector<1x80x144xbf16> to vector<80x144xbf16>
    %cst_8 = arith.constant dense<0.000000e+00> : vector<18x144xf32>
    %11 = tpu.matmul %8, %10, %cst_8 {dimension_numbers = #tpu.dot_dimension_numbers<[1], [0], [0], [1], [0, 0, 1, 1], [], []>} : vector<18x80xbf16>, vector<80x144xbf16>, vector<18x144xf32> -> vector<18x144xf32>
    %12 = arith.addf %7, %11 : vector<18x144xf32>
    %13 = vector.extract_strided_slice %1 {offsets = [2, 0], sizes = [18, 80], strides = [1, 1]} : vector<20x80xbf16> to vector<18x80xbf16>
    %c2 = arith.constant 2 : index
    %c0_9 = arith.constant 0 : index
    %c0_10 = arith.constant 0 : index
    %14 = vector.load %arg2[%c2, %c0_9, %c0_10] : memref<3x80x144xbf16, #tpu.memory_space<vmem>>, vector<1x80x144xbf16>
    %15 = vector.shape_cast %14 : vector<1x80x144xbf16> to vector<80x144xbf16>
    %cst_11 = arith.constant dense<0.000000e+00> : vector<18x144xf32>
    %16 = tpu.matmul %13, %15, %cst_11 {dimension_numbers = #tpu.dot_dimension_numbers<[1], [0], [0], [1], [0, 0, 1, 1], [], []>} : vector<18x80xbf16>, vector<80x144xbf16>, vector<18x144xf32> -> vector<18x144xf32>
    %17 = arith.addf %12, %16 : vector<18x144xf32>
    %c0_12 = arith.constant 0 : index
    %c0_13 = arith.constant 0 : index
    %18 = vector.load %arg3[%c0_12, %c0_13] : memref<1x144xf32, #tpu.memory_space<vmem>>, vector<1x144xf32>
    %19 = vector.broadcast %18 : vector<1x144xf32> to vector<18x144xf32>
    %20 = arith.addf %17, %19 : vector<18x144xf32>
    %cst_14 = arith.constant 0.000000e+00 : f32
    %21 = vector.broadcast %cst_14 : f32 to vector<18x144xf32>
    %22 = arith.maximumf %20, %21 : vector<18x144xf32>
    %23 = tpu.iota {dimensions = array<i32: 0>} : vector<18x144xi32>
    %c1_i32 = arith.constant 1 : i32
    %24 = vector.broadcast %c1_i32 : i32 to vector<18x144xi32>
    %25 = arith.cmpi sge, %23, %24 : vector<18x144xi32>
    %c16_i32 = arith.constant 16 : i32
    %26 = vector.broadcast %c16_i32 : i32 to vector<18x144xi32>
    %27 = arith.cmpi sle, %23, %26 : vector<18x144xi32>
    %28 = arith.andi %25, %27 : vector<18x144xi1>
    %cst_15 = arith.constant 0.000000e+00 : f32
    %29 = vector.broadcast %cst_15 : f32 to vector<18x144xf32>
    %30 = arith.select %28, %22, %29 : vector<18x144xi1>, vector<18x144xf32>
    %31 = arith.truncf %30 : vector<18x144xf32> to vector<18x144xbf16>
    %cst_16 = arith.constant 0.000000e+00 : f32
    %32 = vector.broadcast %cst_16 : f32 to vector<16x128xf32>
    %33 = vector.extract_strided_slice %31 {offsets = [0, 0], sizes = [16, 144], strides = [1, 1]} : vector<18x144xbf16> to vector<16x144xbf16>
    %c0_17 = arith.constant 0 : index
    %c0_18 = arith.constant 0 : index
    %c0_19 = arith.constant 0 : index
    %34 = vector.load %arg4[%c0_17, %c0_18, %c0_19] : memref<3x144x128xbf16, #tpu.memory_space<vmem>>, vector<1x144x128xbf16>
    %35 = vector.shape_cast %34 : vector<1x144x128xbf16> to vector<144x128xbf16>
    %cst_20 = arith.constant dense<0.000000e+00> : vector<16x128xf32>
    %36 = tpu.matmul %33, %35, %cst_20 {dimension_numbers = #tpu.dot_dimension_numbers<[1], [0], [0], [1], [0, 0, 1, 1], [], []>} : vector<16x144xbf16>, vector<144x128xbf16>, vector<16x128xf32> -> vector<16x128xf32>
    %37 = arith.addf %32, %36 : vector<16x128xf32>
    %38 = vector.extract_strided_slice %31 {offsets = [1, 0], sizes = [16, 144], strides = [1, 1]} : vector<18x144xbf16> to vector<16x144xbf16>
    %c1_21 = arith.constant 1 : index
    %c0_22 = arith.constant 0 : index
    %c0_23 = arith.constant 0 : index
    %39 = vector.load %arg4[%c1_21, %c0_22, %c0_23] : memref<3x144x128xbf16, #tpu.memory_space<vmem>>, vector<1x144x128xbf16>
    %40 = vector.shape_cast %39 : vector<1x144x128xbf16> to vector<144x128xbf16>
    %cst_24 = arith.constant dense<0.000000e+00> : vector<16x128xf32>
    %41 = tpu.matmul %38, %40, %cst_24 {dimension_numbers = #tpu.dot_dimension_numbers<[1], [0], [0], [1], [0, 0, 1, 1], [], []>} : vector<16x144xbf16>, vector<144x128xbf16>, vector<16x128xf32> -> vector<16x128xf32>
    %42 = arith.addf %37, %41 : vector<16x128xf32>
    %43 = vector.extract_strided_slice %31 {offsets = [2, 0], sizes = [16, 144], strides = [1, 1]} : vector<18x144xbf16> to vector<16x144xbf16>
    %c2_25 = arith.constant 2 : index
    %c0_26 = arith.constant 0 : index
    %c0_27 = arith.constant 0 : index
    %44 = vector.load %arg4[%c2_25, %c0_26, %c0_27] : memref<3x144x128xbf16, #tpu.memory_space<vmem>>, vector<1x144x128xbf16>
    %45 = vector.shape_cast %44 : vector<1x144x128xbf16> to vector<144x128xbf16>
    %cst_28 = arith.constant dense<0.000000e+00> : vector<16x128xf32>
    %46 = tpu.matmul %43, %45, %cst_28 {dimension_numbers = #tpu.dot_dimension_numbers<[1], [0], [0], [1], [0, 0, 1, 1], [], []>} : vector<16x144xbf16>, vector<144x128xbf16>, vector<16x128xf32> -> vector<16x128xf32>
    %47 = arith.addf %42, %46 : vector<16x128xf32>
    %c0_29 = arith.constant 0 : index
    %c0_30 = arith.constant 0 : index
    %48 = vector.load %arg5[%c0_29, %c0_30] : memref<1x128xf32, #tpu.memory_space<vmem>>, vector<1x128xf32>
    %49 = vector.broadcast %48 : vector<1x128xf32> to vector<16x128xf32>
    %50 = arith.addf %47, %49 : vector<16x128xf32>
    %cst_31 = arith.constant 0.000000e+00 : f32
    %51 = vector.broadcast %cst_31 : f32 to vector<16x128xf32>
    %52 = arith.maximumf %50, %51 : vector<16x128xf32>
    %c0_32 = arith.constant 0 : index
    %c0_33 = arith.constant 0 : index
    %c0_34 = arith.constant 0 : index
    %53 = vector.load %arg6[%c0_32, %c0_33, %c0_34] : memref<1x16x128xf32, #tpu.memory_space<vmem>>, vector<1x16x128xf32>
    %54 = vector.shape_cast %53 : vector<1x16x128xf32> to vector<16x128xf32>
    %55 = vector.shape_cast %52 : vector<16x128xf32> to vector<1x16x128xf32>
    tpu.vector_store %arg6[%c0_32, %c0_33, %c0_34], %55 {strides = array<i32>} : memref<1x16x128xf32, #tpu.memory_space<vmem>>, vector<1x16x128xf32>,
    return
  }
  func.func @transform_0(%arg0: i32) -> (i32, i32, i32) {
    %c0_i32 = arith.constant 0 : i32
    %c0_i32_0 = arith.constant 0 : i32
    %c0_i32_1 = arith.constant 0 : i32
    return %arg0, %c0_i32, %c0_i32_0 : i32, i32, i32
  }
  func.func @transform_1(%arg0: i32) -> (i32, i32, i32) {
    %c0_i32 = arith.constant 0 : i32
    %c0_i32_0 = arith.constant 0 : i32
    %c0_i32_1 = arith.constant 0 : i32
    %c0_i32_2 = arith.constant 0 : i32
    return %c0_i32, %c0_i32_0, %c0_i32_1 : i32, i32, i32
  }
  func.func @transform_2(%arg0: i32) -> (i32, i32) {
    %c0_i32 = arith.constant 0 : i32
    %c0_i32_0 = arith.constant 0 : i32
    %c0_i32_1 = arith.constant 0 : i32
    return %c0_i32, %c0_i32_0 : i32, i32
  }
  func.func @transform_3(%arg0: i32) -> (i32, i32, i32) {
    %c0_i32 = arith.constant 0 : i32
    %c0_i32_0 = arith.constant 0 : i32
    %c0_i32_1 = arith.constant 0 : i32
    %c0_i32_2 = arith.constant 0 : i32
    return %c0_i32, %c0_i32_0, %c0_i32_1 : i32, i32, i32
  }
  func.func @transform_4(%arg0: i32) -> (i32, i32) {
    %c0_i32 = arith.constant 0 : i32
    %c0_i32_0 = arith.constant 0 : i32
    %c0_i32_1 = arith.constant 0 : i32
    return %c0_i32, %c0_i32_0 : i32, i32
  }
  func.func @transform_5(%arg0: i32) -> (i32, i32, i32) {
    %c0_i32 = arith.constant 0 : i32
    %c0_i32_0 = arith.constant 0 : i32
    %c0_i32_1 = arith.constant 0 : i32
    return %arg0, %c0_i32, %c0_i32_0 : i32, i32, i32
  }
}

</mosaic_0001>

<llo_original>
// kernel: tpu_custom_call.1
$region0: #{tpu_custom_call.1}
  #allocation0 [shape = 'u32[]', space=smem, size = 0x4, offset = 0x4, fixed_abs, tag = 'smem constant byte address 0x4 - core index']
  #allocation1 [shape = 'u32[72,128]{1,0:T(1,128)}', space=vmem, size = 0x9000, scoped, tag = 'internal scratch']
  %s0 = inlined_call_operand.vmem [shape: bf16[2,20,80], index: 0, kind: input, shape index: {}]
  %s1 = inlined_call_operand.vmem [shape: bf16[3,80,144], index: 1, kind: input, shape index: {}]
  %s2 = inlined_call_operand.vmem [shape: f32[1,144], index: 2, kind: input, shape index: {}]
  %s3 = inlined_call_operand.vmem [shape: bf16[3,144,128], index: 3, kind: input, shape index: {}]
  %s4 = inlined_call_operand.vmem [shape: f32[1,128], index: 4, kind: input, shape index: {}]
  %s5 = inlined_call_operand.hbm [shape: f32[2,16,128], index: 5, kind: output, shape index: {}]
  %s6 = sld [smem:[#allocation0]]
  $region53: #{tpu_custom_call.1} parent=0
    _
  %s8 = ssub.s32 1, %s6
  %s9 = scalar_select 0, %s8, %s6
  $region1: #{tpu_custom_call.1} parent=0
    #allocation2 [shape = 'u8[16384]{0}', space=vmem, size = 0x4000, scoped, tag = 'output window, operand 0']
    #allocation3 [shape = 's32[2]{0}', space=sflag, size = 0x8, scoped, tag = 'scoped memory for tpu_custom_call.1']
    %10 = vsyncpa [#allocation3], 0
    %s11 = scalar_lea.sflag [#allocation3], 1
    %12 = vsyncpa %s11, 0
    loop: start=0, step=1, limit=4
    $region2: #{tpu_custom_call.1} parent=1 // loop_pre_header
      _
    $region3: #{tpu_custom_call.1} parent=1 // loop_header
      %s14 = sphi 0, %s18
      %p15 = scmp.ge.s32.totalorder %s14, 4
      %s24 = sphi 0, %s26
      %s27 = sphi 0, %s24
      %s28 = sphi 0, %s27
      %s44 = sphi 0, %s28
      %s48 = sphi 0, %s48
      %s50 = sphi 0, %s48
      %s51 = sphi 0, %s50
      %s65 = sphi 0, %s51
      %s69 = sphi 0, %s69
      %s71 = sphi 0, %s69
      %s72 = sphi 0, %s71
      %s86 = sphi 0, %s72
      %s90 = sphi 0, %s90
      %s92 = sphi 0, %s90
      %s93 = sphi 0, %s92
      %s107 = sphi 0, %s93
      %s111 = sphi 0, %s111
      %s113 = sphi 0, %s111
      %s114 = sphi 0, %s113
      %s128 = sphi 0, %s114
      %s134 = sphi 0, %s136
      %s137 = sphi 0, %s134
      %s138 = sphi 0, %s137
      %s154 = sphi 0, %s138
    $region4: #{tpu_custom_call.1} parent=1 // loop_header_branch
      %17 = sbr.rel (%p15) target = $region8
    $region5: #{tpu_custom_call.1} parent=1 // loop_body
      %s19 = ssub.s32 %s14, 1
      %s20 = ssub.s32 %s14, 2
      %s21 = sadd.s32 %s14, 1
      %s22 = ssub.s32 %s14, %s21
      %p23 = scmp.eq.s32.totalorder %s22, 0
      %s25 = sadd.s32 %s24, 1
      %s26 = scalar_select %p23, %s24, %s25
      %p29 = pneg %p23
      %p30 = scmp.eq.s32.totalorder %s14, 1
      %p31 = por %p29, %p30
      %p32 = scmp.ne.s32.totalorder %s24, %s27
      %p33 = scmp.eq.s32.totalorder %s14, 0
      %p34 = por %p32, %p33
      %p35 = scmp.ne.s32.totalorder %s24, %s27
      %p36 = scmp.eq.s32.totalorder %s19, 1
      %p37 = por %p35, %p36
      %p38 = scmp.ne.s32.totalorder %s27, %s28
      %p39 = scmp.eq.s32.totalorder %s19, 0
      %p40 = por %p38, %p39
      %p41 = scmp.ne.s32.totalorder %s27, %s28
      %p42 = scmp.eq.s32.totalorder %s20, 1
      %p43 = por %p41, %p42
      %p45 = scmp.ne.s32.totalorder %s28, %s44
      %p46 = scmp.eq.s32.totalorder %s20, 0
      %p47 = por %p45, %p46
      %s49 = sadd.s32 %s48, 1
      %p52 = scmp.eq.s32.totalorder %s14, 1
      %p53 = scmp.ne.s32.totalorder %s48, %s50
      %p54 = scmp.eq.s32.totalorder %s14, 0
      %p55 = por %p53, %p54
      %p56 = scmp.ne.s32.totalorder %s48, %s50
      %p57 = scmp.eq.s32.totalorder %s19, 1
      %p58 = por %p56, %p57
      %p59 = scmp.ne.s32.totalorder %s50, %s51
      %p60 = scmp.eq.s32.totalorder %s19, 0
      %p61 = por %p59, %p60
      %p62 = scmp.ne.s32.totalorder %s50, %s51
      %p63 = scmp.eq.s32.totalorder %s20, 1
      %p64 = por %p62, %p63
      %p66 = scmp.ne.s32.totalorder %s51, %s65
      %p67 = scmp.eq.s32.totalorder %s20, 0
      %p68 = por %p66, %p67
      %s70 = sadd.s32 %s69, 1
      %p73 = scmp.eq.s32.totalorder %s14, 1
      %p74 = scmp.ne.s32.totalorder %s69, %s71
      %p75 = scmp.eq.s32.totalorder %s14, 0
      %p76 = por %p74, %p75
      %p77 = scmp.ne.s32.totalorder %s69, %s71
      %p78 = scmp.eq.s32.totalorder %s19, 1
      %p79 = por %p77, %p78
      %p80 = scmp.ne.s32.totalorder %s71, %s72
      %p81 = scmp.eq.s32.totalorder %s19, 0
      %p82 = por %p80, %p81
      %p83 = scmp.ne.s32.totalorder %s71, %s72
      %p84 = scmp.eq.s32.totalorder %s20, 1
      %p85 = por %p83, %p84
      %p87 = scmp.ne.s32.totalorder %s72, %s86
      %p88 = scmp.eq.s32.totalorder %s20, 0
      %p89 = por %p87, %p88
      %s91 = sadd.s32 %s90, 1
      %p94 = scmp.eq.s32.totalorder %s14, 1
      %p95 = scmp.ne.s32.totalorder %s90, %s92
      %p96 = scmp.eq.s32.totalorder %s14, 0
      %p97 = por %p95, %p96
      %p98 = scmp.ne.s32.totalorder %s90, %s92
      %p99 = scmp.eq.s32.totalorder %s19, 1
      %p100 = por %p98, %p99
      %p101 = scmp.ne.s32.totalorder %s92, %s93
      %p102 = scmp.eq.s32.totalorder %s19, 0
      %p103 = por %p101, %p102
      %p104 = scmp.ne.s32.totalorder %s92, %s93
      %p105 = scmp.eq.s32.totalorder %s20, 1
      %p106 = por %p104, %p105
      %p108 = scmp.ne.s32.totalorder %s93, %s107
      %p109 = scmp.eq.s32.totalorder %s20, 0
      %p110 = por %p108, %p109
      %s112 = sadd.s32 %s111, 1
      %p115 = scmp.eq.s32.totalorder %s14, 1
      %p116 = scmp.ne.s32.totalorder %s111, %s113
      %p117 = scmp.eq.s32.totalorder %s14, 0
      %p118 = por %p116, %p117
      %p119 = scmp.ne.s32.totalorder %s111, %s113
      %p120 = scmp.eq.s32.totalorder %s19, 1
      %p121 = por %p119, %p120
      %p122 = scmp.ne.s32.totalorder %s113, %s114
      %p123 = scmp.eq.s32.totalorder %s19, 0
      %p124 = por %p122, %p123
      %p125 = scmp.ne.s32.totalorder %s113, %s114
      %p126 = scmp.eq.s32.totalorder %s20, 1
      %p127 = por %p125, %p126
      %p129 = scmp.ne.s32.totalorder %s114, %s128
      %p130 = scmp.eq.s32.totalorder %s20, 0
      %p131 = por %p129, %p130
      %s132 = ssub.s32 %s14, %s21
      %p133 = scmp.eq.s32.totalorder %s132, 0
      %s135 = sadd.s32 %s134, 1
      %s136 = scalar_select %p133, %s134, %s135
      %p139 = pneg %p133
      %p140 = scmp.eq.s32.totalorder %s14, 1
      %p141 = por %p139, %p140
      %p142 = scmp.ne.s32.totalorder %s134, %s137
      %p143 = scmp.eq.s32.totalorder %s14, 0
      %p144 = por %p142, %p143
      %p145 = scmp.ne.s32.totalorder %s134, %s137
      %p146 = scmp.eq.s32.totalorder %s19, 1
      %p147 = por %p145, %p146
      %p148 = scmp.ne.s32.totalorder %s137, %s138
      %p149 = scmp.eq.s32.totalorder %s19, 0
      %p150 = por %p148, %p149
      %p151 = scmp.ne.s32.totalorder %s137, %s138
      %p152 = scmp.eq.s32.totalorder %s20, 1
      %p153 = por %p151, %p152
      %p155 = scmp.ne.s32.totalorder %s138, %s154
      %p156 = scmp.eq.s32.totalorder %s20, 0
      %p157 = por %p155, %p156
      %p158 = scmp.le.s32.totalorder 1, %s14
      %p159 = scmp.lt.s32.totalorder %s14, 3
      %p160 = pnand %p158, %p159
      %p161 = pneg %p160
      // Predicated region
      $region9: #{tpu_custom_call.1} parent=5 // pred_check
        _
      $region10: #{tpu_custom_call.1} parent=5 // pred_check_branch
        %163 = sbr.rel (%p160) target = $region12
      $region11: #{tpu_custom_call.1} parent=5 // pred_region
        %s164 = ssub.s32 %s14, 1
        // Predicated region
        $region13: #{tpu_custom_call.1} parent=11 // pred_check
          %p165 = pneg %p61
        $region14: #{tpu_custom_call.1} parent=11 // pred_check_branch
          %167 = sbr.rel (%p165) target = $region16
        $region15: #{tpu_custom_call.1} parent=11 // pred_region
          _
        $region16: #{tpu_custom_call.1} parent=11 // pred_fallthru
          _
        // Predicated region
        $region17: #{tpu_custom_call.1} parent=11 // pred_check
          %p168 = pneg %p82
        $region18: #{tpu_custom_call.1} parent=11 // pred_check_branch
          %170 = sbr.rel (%p168) target = $region20
        $region19: #{tpu_custom_call.1} parent=11 // pred_region
          _
        $region20: #{tpu_custom_call.1} parent=11 // pred_fallthru
          _
        // Predicated region
        $region21: #{tpu_custom_call.1} parent=11 // pred_check
          %p171 = pneg %p103
        $region22: #{tpu_custom_call.1} parent=11 // pred_check_branch
          %173 = sbr.rel (%p171) target = $region24
        $region23: #{tpu_custom_call.1} parent=11 // pred_region
          _
        $region24: #{tpu_custom_call.1} parent=11 // pred_fallthru
          _
        // Predicated region
        $region25: #{tpu_custom_call.1} parent=11 // pred_check
          %p174 = pneg %p124
        $region26: #{tpu_custom_call.1} parent=11 // pred_check_branch
          %176 = sbr.rel (%p174) target = $region28
        $region27: #{tpu_custom_call.1} parent=11 // pred_region
          _
        $region28: #{tpu_custom_call.1} parent=11 // pred_fallthru
          _
      $region12: #{tpu_custom_call.1} parent=5 // pred_fallthru
        _
      %p177 = scmp.lt.s32.totalorder %s14, 2
      // Predicated region
      $region29: #{tpu_custom_call.1} parent=5 // pred_check
        %p178 = pneg %p177
      $region30: #{tpu_custom_call.1} parent=5 // pred_check_branch
        %180 = sbr.rel (%p178) target = $region32
      $region31: #{tpu_custom_call.1} parent=5 // pred_region
        // Predicated region
        $region33: #{tpu_custom_call.1} parent=31 // pred_check
          %p181 = pneg %p34
        $region34: #{tpu_custom_call.1} parent=31 // pred_check_branch
          %183 = sbr.rel (%p181) target = $region36
        $region35: #{tpu_custom_call.1} parent=31 // pred_region
          %p184 = scmp.lt.s32.totalorder %s14, 1
          %s185 = scalar_select %p184, %s14, 1
          %s186 = smul.addr %s185, 3
          %s187 = smul.addr %s186, 4
          %s188 = scalar_lea.vmem %s0, %s187
        $region36: #{tpu_custom_call.1} parent=31 // pred_fallthru
          _
      $region32: #{tpu_custom_call.1} parent=5 // pred_fallthru
        _
      %p189 = scmp.le.s32.totalorder 1, %s14
      %p190 = scmp.lt.s32.totalorder %s14, 3
      %p191 = pnand %p189, %p190
      %p192 = pneg %p191
      // Predicated region
      $region37: #{tpu_custom_call.1} parent=5 // pred_check
        _
      $region38: #{tpu_custom_call.1} parent=5 // pred_check_branch
        %194 = sbr.rel (%p191) target = $region40
      $region39: #{tpu_custom_call.1} parent=5 // pred_region
        %s195 = ssub.s32 %s14, 1
        %p196 = scmp.lt.s32.totalorder %s19, 1
        %s197 = scalar_select %p196, %s19, 1
        %s198 = smul.addr %s197, 3
        %s199 = smul.addr %s198, 4
        %s200 = scalar_lea.vmem %s0, %s199
        %p201 = pneg %p40
        %p202 = pneg %p37
        %p203 = pneg %p61
        %p204 = pneg %p58
        %p205 = pneg %p82
        %p206 = pneg %p79
        %p207 = pneg %p103
        %p208 = pneg %p100
        %p209 = pneg %p124
        %p210 = pneg %p121
        %p211 = pneg %p150
        %p212 = pneg %p147
        %s213 = sand.u32 %s137, 1
        %s214 = scalar_lea.sflag [#allocation3], %s213
        %s215 = sand.u32 %s137, 1
        %s216 = smul.addr %s215, 16
        %s217 = scalar_lea.vmem [#allocation2], %s216
        %p218 = scmp.lt.s32.totalorder %s19, 1
        %s219 = scalar_select %p218, %s19, 1
        %s220 = smul.addr %s219, 3
        %s221 = smul.addr %s220, 4
        %s222 = scalar_lea.vmem %s0, %s221
        %v224 = vld [vmem:[%s222] sm:$0xf]
        %v225 = vld [vmem:[%s222 + $0x4] sm:$0xf]
        %v226 = vld [vmem:[%s222 + $0x8] sm:$0x3]
        %v227 = vld [vmem:[%s1] sm:$0xff]
        %v228 = vld [vmem:[%s1 + $0x8] sm:$0xff]
        %v229 = vld [vmem:[%s1 + $0x10] sm:$0xff]
        %v230 = vld [vmem:[%s1 + $0x18] sm:$0xff]
        %v231 = vld [vmem:[%s1 + $0x20] sm:$0xff]
        %v232 = vld [vmem:[%s1 + $0x28] sm:$0xff]
        %v233 = vld [vmem:[%s1 + $0x30] sm:$0xff]
        %v234 = vld [vmem:[%s1 + $0x38] sm:$0xff]
        %v235 = vld [vmem:[%s1 + $0x40] sm:$0xff]
        %v236 = vld [vmem:[%s1 + $0x48] sm:$0xff]
        %s237 = scalar_lea.vmem %s1, 80
        %v238 = vld [vmem:[%s237] sm:$0xff]
        %v239 = vld [vmem:[%s237 + $0x8] sm:$0xff]
        %v240 = vld [vmem:[%s237 + $0x10] sm:$0xff]
        %v241 = vld [vmem:[%s237 + $0x18] sm:$0xff]
        %v242 = vld [vmem:[%s237 + $0x20] sm:$0xff]
        %v243 = vld [vmem:[%s237 + $0x28] sm:$0xff]
        %v244 = vld [vmem:[%s237 + $0x30] sm:$0xff]
        %v245 = vld [vmem:[%s237 + $0x38] sm:$0xff]
        %v246 = vld [vmem:[%s237 + $0x40] sm:$0xff]
        %v247 = vld [vmem:[%s237 + $0x48] sm:$0xff]
        %v251 = vunpack.c.l.b16 %v224
        %v252 = vunpack.c.l.b16 %v225
        %v253 = vunpack.c.l.b16 %v226
        %v254 = vpack.c.b16 %v252, %v251
        %v255 = vpack.c.b16 %v253, %v253
        %vm256 = vsmask.f32 7424
        %v258 = vshrl.u32 %v254, 16
        %v260 = vshll.u32 %v254, 16
        %v262 = vrot.slane %v260, 1
        %v263 = vor.u32 %v258, %v262
        %v265 = vshll.u32 %v255, 16
        %v267 = vrot.slane %v265, 1
        %v268 = vsel %vm256, %v263, %v267
        %v269 = vshrl.u32 %v255, 16
        %v271 = vor.u32 %v269, %v267
        %v282 = vunpack.c.l.b16 %v238
        %v283 = vunpack.c.h.b16 %v238
        %v284 = vunpack.c.l.b16 %v239
        %v285 = vunpack.c.h.b16 %v239
        %v286 = vunpack.c.l.b16 %v240
        %v287 = vunpack.c.h.b16 %v240
        %v288 = vunpack.c.l.b16 %v241
        %v289 = vunpack.c.h.b16 %v241
        %v290 = vunpack.c.l.b16 %v242
        %v291 = vunpack.c.h.b16 %v242
        %v292 = vunpack.c.l.b16 %v243
        %v293 = vunpack.c.h.b16 %v243
        %v294 = vunpack.c.l.b16 %v244
        %v295 = vunpack.c.h.b16 %v244
        %v296 = vunpack.c.l.b16 %v245
        %v297 = vunpack.c.h.b16 %v245
        %v298 = vunpack.c.l.b16 %v246
        %v299 = vunpack.c.h.b16 %v246
        %v300 = vunpack.c.l.b16 %v247
        %v301 = vunpack.c.h.b16 %v247
        %v302 = vpack.c.b16 %v284, %v282
        %v303 = vpack.c.b16 %v285, %v283
        %v304 = vpack.c.b16 %v288, %v286
        %v305 = vpack.c.b16 %v289, %v287
        %v306 = vpack.c.b16 %v292, %v290
        %v307 = vpack.c.b16 %v293, %v291
        %v308 = vpack.c.b16 %v296, %v294
        %v309 = vpack.c.b16 %v297, %v295
        %v310 = vpack.c.b16 %v300, %v298
        %v311 = vpack.c.b16 %v301, %v299
        %vm322 = vcmask 654336
        %v324 = vsel %vm322, %v268, 0
        %v327 = vsel %vm322, %v271, 0
        %329 = vmatpush.bf16.msra.mxu0 0
        %330 = vmatpush.bf16.msra.mxu0 0
        %331 = vmatpush.bf16.msra.mxu0 0
        %332 = vmatpush.bf16.msra.mxu0 %v310
        %333 = vmatpush.bf16.msra.mxu0 %v308
        %334 = vmatpush.bf16.msra.mxu0 %v306
        %335 = vmatpush.bf16.msra.mxu0 %v304
        %336 = vmatpush.bf16.msra.mxu0 %v302
        %337 = vmatmul.bf16.gmra.mxu0 %v324
        %v338 = vpop.f32.mrf.mxu0
        %v339 = vadd.f32 0.0, %v338
        %v340 = vpop.f32.mrf.mxu0
        %v341 = vadd.f32 0.0, %v340
        %342 = vmatmul.bf16.gmra.mxu0 %v327
        %v343 = vpop.f32.mrf.mxu0
        %v344 = vadd.f32 0.0, %v343
        %v345 = vpop.f32.mrf.mxu0
        %346 = vdwg.mxu0
        %347 = vmatpush.bf16.msra.mxu0 0
        %348 = vmatpush.bf16.msra.mxu0 0
        %349 = vmatpush.bf16.msra.mxu0 0
        %350 = vmatpush.bf16.msra.mxu0 %v311
        %351 = vmatpush.bf16.msra.mxu0 %v309
        %352 = vmatpush.bf16.msra.mxu0 %v307
        %353 = vmatpush.bf16.msra.mxu0 %v305
        %354 = vmatpush.bf16.msra.mxu0 %v303
        %355 = vmatmul.bf16.gmra.mxu0 %v324
        %v356 = vpop.f32.mrf.mxu0
        %v357 = vadd.f32 0.0, %v356
        %v358 = vpop.f32.mrf.mxu0
        %v359 = vadd.f32 0.0, %v358
        %360 = vmatmul.bf16.gmra.mxu0 %v327
        %v361 = vpop.f32.mrf.mxu0
        %v362 = vadd.f32 0.0, %v361
        %v363 = vpop.f32.mrf.mxu0
        %364 = vdwg.mxu0
        %v375 = vunpack.c.l.b16 %v227
        %v376 = vunpack.c.h.b16 %v227
        %v377 = vunpack.c.l.b16 %v228
        %v378 = vunpack.c.h.b16 %v228
        %v379 = vunpack.c.l.b16 %v229
        %v380 = vunpack.c.h.b16 %v229
        %v381 = vunpack.c.l.b16 %v230
        %v382 = vunpack.c.h.b16 %v230
        %v383 = vunpack.c.l.b16 %v231
        %v384 = vunpack.c.h.b16 %v231
        %v385 = vunpack.c.l.b16 %v232
        %v386 = vunpack.c.h.b16 %v232
        %v387 = vunpack.c.l.b16 %v233
        %v388 = vunpack.c.h.b16 %v233
        %v389 = vunpack.c.l.b16 %v234
        %v390 = vunpack.c.h.b16 %v234
        %v391 = vunpack.c.l.b16 %v235
        %v392 = vunpack.c.h.b16 %v235
        %v393 = vunpack.c.l.b16 %v236
        %v394 = vunpack.c.h.b16 %v236
        %v395 = vpack.c.b16 %v377, %v375
        %v396 = vpack.c.b16 %v378, %v376
        %v397 = vpack.c.b16 %v381, %v379
        %v398 = vpack.c.b16 %v382, %v380
        %v399 = vpack.c.b16 %v385, %v383
        %v400 = vpack.c.b16 %v386, %v384
        %v401 = vpack.c.b16 %v389, %v387
        %v402 = vpack.c.b16 %v390, %v388
        %v403 = vpack.c.b16 %v393, %v391
        %v404 = vpack.c.b16 %v394, %v392
        %v415 = vsel %vm322, %v254, 0
        %v417 = vsel %vm322, %v255, 0
        %419 = vmatpush.bf16.msra.mxu0 0
        %420 = vmatpush.bf16.msra.mxu0 0
        %421 = vmatpush.bf16.msra.mxu0 0
        %422 = vmatpush.bf16.msra.mxu0 %v403
        %423 = vmatpush.bf16.msra.mxu0 %v401
        %424 = vmatpush.bf16.msra.mxu0 %v399
        %425 = vmatpush.bf16.msra.mxu0 %v397
        %426 = vmatpush.bf16.msra.mxu0 %v395
        %427 = vmatmul.bf16.gmra.mxu0 %v415
        %v428 = vpop.f32.mrf.mxu0
        %v429 = vadd.f32 %v339, %v428
        %v430 = vpop.f32.mrf.mxu0
        %v431 = vadd.f32 %v341, %v430
        %432 = vmatmul.bf16.gmra.mxu0 %v417
        %v433 = vpop.f32.mrf.mxu0
        %v434 = vadd.f32 %v344, %v433
        %v435 = vpop.f32.mrf.mxu0
        %436 = vdwg.mxu0
        %437 = vmatpush.bf16.msra.mxu0 0
        %438 = vmatpush.bf16.msra.mxu0 0
        %439 = vmatpush.bf16.msra.mxu0 0
        %440 = vmatpush.bf16.msra.mxu0 %v404
        %441 = vmatpush.bf16.msra.mxu0 %v402
        %442 = vmatpush.bf16.msra.mxu0 %v400
        %443 = vmatpush.bf16.msra.mxu0 %v398
        %444 = vmatpush.bf16.msra.mxu0 %v396
        %445 = vmatmul.bf16.gmra.mxu0 %v415
        %v446 = vpop.f32.mrf.mxu0
        %v447 = vadd.f32 %v357, %v446
        %v448 = vpop.f32.mrf.mxu0
        %v449 = vadd.f32 %v359, %v448
        %450 = vmatmul.bf16.gmra.mxu0 %v417
        %v451 = vpop.f32.mrf.mxu0
        %v452 = vadd.f32 %v362, %v451
        %v453 = vpop.f32.mrf.mxu0
        %454 = vdwg.mxu0
        %s455 = scalar_lea.vmem %s1, 160
        %v456 = vld [vmem:[%s455] sm:$0xff]
        %v457 = vld [vmem:[%s455 + $0x8] sm:$0xff]
        %v458 = vld [vmem:[%s455 + $0x10] sm:$0xff]
        %v459 = vld [vmem:[%s455 + $0x18] sm:$0xff]
        %v460 = vld [vmem:[%s455 + $0x20] sm:$0xff]
        %v461 = vld [vmem:[%s455 + $0x28] sm:$0xff]
        %v462 = vld [vmem:[%s455 + $0x30] sm:$0xff]
        %v463 = vld [vmem:[%s455 + $0x38] sm:$0xff]
        %v464 = vld [vmem:[%s455 + $0x40] sm:$0xff]
        %v465 = vld [vmem:[%s455 + $0x48] sm:$0xff]
        %vm466 = vcmask 1046528
        %v467 = vrot.slane %v254, 1
        %v468 = vrot.slane %v255, 1
        %v469 = vsel %vm466, %v467, %v468
        %v480 = vunpack.c.l.b16 %v456
        %v481 = vunpack.c.h.b16 %v456
        %v482 = vunpack.c.l.b16 %v457
        %v483 = vunpack.c.h.b16 %v457
        %v484 = vunpack.c.l.b16 %v458
        %v485 = vunpack.c.h.b16 %v458
        %v486 = vunpack.c.l.b16 %v459
        %v487 = vunpack.c.h.b16 %v459
        %v488 = vunpack.c.l.b16 %v460
        %v489 = vunpack.c.h.b16 %v460
        %v490 = vunpack.c.l.b16 %v461
        %v491 = vunpack.c.h.b16 %v461
        %v492 = vunpack.c.l.b16 %v462
        %v493 = vunpack.c.h.b16 %v462
        %v494 = vunpack.c.l.b16 %v463
        %v495 = vunpack.c.h.b16 %v463
        %v496 = vunpack.c.l.b16 %v464
        %v497 = vunpack.c.h.b16 %v464
        %v498 = vunpack.c.l.b16 %v465
        %v499 = vunpack.c.h.b16 %v465
        %v500 = vpack.c.b16 %v482, %v480
        %v501 = vpack.c.b16 %v483, %v481
        %v502 = vpack.c.b16 %v486, %v484
        %v503 = vpack.c.b16 %v487, %v485
        %v504 = vpack.c.b16 %v490, %v488
        %v505 = vpack.c.b16 %v491, %v489
        %v506 = vpack.c.b16 %v494, %v492
        %v507 = vpack.c.b16 %v495, %v493
        %v508 = vpack.c.b16 %v498, %v496
        %v509 = vpack.c.b16 %v499, %v497
        %v521 = vsel %vm322, %v469, 0
        %v524 = vsel %vm322, %v468, 0
        %526 = vmatpush.bf16.msra.mxu0 0
        %527 = vmatpush.bf16.msra.mxu0 0
        %528 = vmatpush.bf16.msra.mxu0 0
        %529 = vmatpush.bf16.msra.mxu0 %v508
        %530 = vmatpush.bf16.msra.mxu0 %v506
        %531 = vmatpush.bf16.msra.mxu0 %v504
        %532 = vmatpush.bf16.msra.mxu0 %v502
        %533 = vmatpush.bf16.msra.mxu0 %v500
        %534 = vmatmul.bf16.gmra.mxu0 %v521
        %v535 = vpop.f32.mrf.mxu0
        %v536 = vadd.f32 0.0, %v535
        %v537 = vpop.f32.mrf.mxu0
        %v538 = vadd.f32 0.0, %v537
        %539 = vmatmul.bf16.gmra.mxu0 %v524
        %v540 = vpop.f32.mrf.mxu0
        %v541 = vadd.f32 0.0, %v540
        %v542 = vpop.f32.mrf.mxu0
        %543 = vdwg.mxu0
        %544 = vmatpush.bf16.msra.mxu0 0
        %545 = vmatpush.bf16.msra.mxu0 0
        %546 = vmatpush.bf16.msra.mxu0 0
        %547 = vmatpush.bf16.msra.mxu0 %v509
        %548 = vmatpush.bf16.msra.mxu0 %v507
        %549 = vmatpush.bf16.msra.mxu0 %v505
        %550 = vmatpush.bf16.msra.mxu0 %v503
        %551 = vmatpush.bf16.msra.mxu0 %v501
        %552 = vmatmul.bf16.gmra.mxu0 %v521
        %v553 = vpop.f32.mrf.mxu0
        %v554 = vadd.f32 0.0, %v553
        %v555 = vpop.f32.mrf.mxu0
        %v556 = vadd.f32 0.0, %v555
        %557 = vmatmul.bf16.gmra.mxu0 %v524
        %v558 = vpop.f32.mrf.mxu0
        %v559 = vadd.f32 0.0, %v558
        %v560 = vpop.f32.mrf.mxu0
        %561 = vdwg.mxu0
        %v562 = vadd.f32 %v429, %v536
        %v563 = vadd.f32 %v447, %v554
        %v564 = vadd.f32 %v431, %v538
        %v565 = vadd.f32 %v449, %v556
        %v566 = vadd.f32 %v434, %v541
        %v567 = vadd.f32 %v452, %v559
        %v568 = vld [vmem:[%s2] sm:$0x3]
        %v570 = vperm.slane %v568, 0
        %v571 = vperm.slane %v568, 1
        %v574 = vadd.f32 %v562, %v570
        %v575 = vadd.f32 %v563, %v571
        %v576 = vadd.f32 %v564, %v570
        %v577 = vadd.f32 %v565, %v571
        %v578 = vadd.f32 %v566, %v570
        %v579 = vadd.f32 %v567, %v571
        %v580 = vmax.f32 %v574, 0.0
        %v581 = vmax.f32 %v575, 0.0
        %v582 = vmax.f32 %v576, 0.0
        %v583 = vmax.f32 %v577, 0.0
        %v584 = vmax.f32 %v578, 0.0
        %v585 = vmax.f32 %v579, 0.0
        %v586 = vlaneseq
        %v587 = vshrl.u32 %v586, 7
        %v588 = vadd.s32 %v587, 8
        %v589 = vadd.s32 %v587, 16
        %vm590 = vcmp.ge.s32.totalorder %v587, 1
        %vm591 = vcmp.ge.s32.totalorder %v588, 1
        %vm592 = vcmp.ge.s32.totalorder %v589, 1
        %vm593 = vcmp.le.s32.totalorder %v587, 16
        %vm594 = vcmp.le.s32.totalorder %v588, 16
        %vm595 = vcmp.le.s32.totalorder %v589, 16
        %vm596 = vmand %vm590, %vm593
        %vm597 = vmand %vm591, %vm594
        %vm598 = vmand %vm592, %vm595
        %v599 = vsel %vm596, %v580, 0.0
        %v600 = vsel %vm596, %v581, 0.0
        %v601 = vsel %vm597, %v582, 0.0
        %v602 = vsel %vm597, %v583, 0.0
        %v603 = vsel %vm598, %v584, 0.0
        %v604 = vsel %vm598, %v585, 0.0
        %v605 = vpack.c.bf16 %v600, %v599
        %v606 = vpack.c.bf16 %v602, %v601
        %v607 = vpack.c.bf16 %v604, %v603
        %v608 = vld [vmem:[%s3] sm:$0xf]
        %v609 = vld [vmem:[%s3 + $0x4] sm:$0xf]
        %v610 = vld [vmem:[%s3 + $0x8] sm:$0xf]
        %v611 = vld [vmem:[%s3 + $0xc] sm:$0xf]
        %v612 = vld [vmem:[%s3 + $0x10] sm:$0xf]
        %v613 = vld [vmem:[%s3 + $0x14] sm:$0xf]
        %v614 = vld [vmem:[%s3 + $0x18] sm:$0xf]
        %v615 = vld [vmem:[%s3 + $0x1c] sm:$0xf]
        %v616 = vld [vmem:[%s3 + $0x20] sm:$0xf]
        %v617 = vld [vmem:[%s3 + $0x24] sm:$0xf]
        %v618 = vld [vmem:[%s3 + $0x28] sm:$0xf]
        %v619 = vld [vmem:[%s3 + $0x2c] sm:$0xf]
        %v620 = vld [vmem:[%s3 + $0x30] sm:$0xf]
        %v621 = vld [vmem:[%s3 + $0x34] sm:$0xf]
        %v622 = vld [vmem:[%s3 + $0x38] sm:$0xf]
        %v623 = vld [vmem:[%s3 + $0x3c] sm:$0xf]
        %v624 = vld [vmem:[%s3 + $0x40] sm:$0xf]
        %v625 = vld [vmem:[%s3 + $0x44] sm:$0xf]
        %s626 = scalar_lea.vmem %s3, 72
        %v627 = vld [vmem:[%s626] sm:$0xf]
        %v628 = vld [vmem:[%s626 + $0x4] sm:$0xf]
        %v629 = vld [vmem:[%s626 + $0x8] sm:$0xf]
        %v630 = vld [vmem:[%s626 + $0xc] sm:$0xf]
        %v631 = vld [vmem:[%s626 + $0x10] sm:$0xf]
        %v632 = vld [vmem:[%s626 + $0x14] sm:$0xf]
        %v633 = vld [vmem:[%s626 + $0x18] sm:$0xf]
        %v634 = vld [vmem:[%s626 + $0x1c] sm:$0xf]
        %v635 = vld [vmem:[%s626 + $0x20] sm:$0xf]
        %v636 = vld [vmem:[%s626 + $0x24] sm:$0xf]
        %v637 = vld [vmem:[%s626 + $0x28] sm:$0xf]
        %v638 = vld [vmem:[%s626 + $0x2c] sm:$0xf]
        %v639 = vld [vmem:[%s626 + $0x30] sm:$0xf]
        %v640 = vld [vmem:[%s626 + $0x34] sm:$0xf]
        %v641 = vld [vmem:[%s626 + $0x38] sm:$0xf]
        %v642 = vld [vmem:[%s626 + $0x3c] sm:$0xf]
        %v643 = vld [vmem:[%s626 + $0x40] sm:$0xf]
        %v644 = vld [vmem:[%s626 + $0x44] sm:$0xf]
        %v648 = vunpack.c.l.b16 %v605
        %v649 = vunpack.c.h.b16 %v605
        %v650 = vunpack.c.l.b16 %v606
        %v651 = vunpack.c.h.b16 %v606
        %v652 = vunpack.c.l.b16 %v607
        %v653 = vunpack.c.h.b16 %v607
        %v654 = vpack.c.b16 %v650, %v648
        %v655 = vpack.c.b16 %v651, %v649
        %v656 = vpack.c.b16 %v652, %v652
        %v657 = vpack.c.b16 %v653, %v653
        %v659 = vshrl.u32 %v654, 16
        %v661 = vshll.u32 %v654, 16
        %v663 = vrot.slane %v661, 1
        %v664 = vor.u32 %v659, %v663
        %v666 = vshll.u32 %v656, 16
        %v668 = vrot.slane %v666, 1
        %v669 = vsel %vm256, %v664, %v668
        %v671 = vshrl.u32 %v655, 16
        %v673 = vshll.u32 %v655, 16
        %v675 = vrot.slane %v673, 1
        %v676 = vor.u32 %v671, %v675
        %v678 = vshll.u32 %v657, 16
        %v680 = vrot.slane %v678, 1
        %v681 = vsel %vm256, %v676, %v680
        %v701 = vunpack.c.l.b16 %v627
        %v702 = vunpack.c.l.b16 %v628
        %v703 = vunpack.c.l.b16 %v629
        %v704 = vunpack.c.l.b16 %v630
        %v705 = vunpack.c.l.b16 %v631
        %v706 = vunpack.c.l.b16 %v632
        %v707 = vunpack.c.l.b16 %v633
        %v708 = vunpack.c.l.b16 %v634
        %v709 = vunpack.c.l.b16 %v635
        %v710 = vunpack.c.l.b16 %v636
        %v711 = vunpack.c.l.b16 %v637
        %v712 = vunpack.c.l.b16 %v638
        %v713 = vunpack.c.l.b16 %v639
        %v714 = vunpack.c.l.b16 %v640
        %v715 = vunpack.c.l.b16 %v641
        %v716 = vunpack.c.l.b16 %v642
        %v717 = vunpack.c.l.b16 %v643
        %v718 = vunpack.c.l.b16 %v644
        %v719 = vpack.c.b16 %v702, %v701
        %v720 = vpack.c.b16 %v704, %v703
        %v721 = vpack.c.b16 %v706, %v705
        %v722 = vpack.c.b16 %v708, %v707
        %v723 = vpack.c.b16 %v710, %v709
        %v724 = vpack.c.b16 %v712, %v711
        %v725 = vpack.c.b16 %v714, %v713
        %v726 = vpack.c.b16 %v716, %v715
        %v727 = vpack.c.b16 %v718, %v717
        %vm737 = vcmask 130048
        %v739 = vsel %vm737, %v681, 0
        %741 = vmatpush.bf16.msra.mxu0 %v726
        %742 = vmatpush.bf16.msra.mxu0 %v725
        %743 = vmatpush.bf16.msra.mxu0 %v724
        %744 = vmatpush.bf16.msra.mxu0 %v723
        %745 = vmatpush.bf16.msra.mxu0 %v722
        %746 = vmatpush.bf16.msra.mxu0 %v721
        %747 = vmatpush.bf16.msra.mxu0 %v720
        %748 = vmatpush.bf16.msra.mxu0 %v719
        %749 = vmatmul.bf16.gmra.mxu0 %v669
        %v750 = vpop.f32.mrf.mxu0
        %v751 = vadd.f32 0.0, %v750
        %v752 = vpop.f32.mrf.mxu0
        %v753 = vadd.f32 0.0, %v752
        %754 = vdwg.mxu0
        %755 = vmatpush.bf16.msra.mxu0 0
        %756 = vmatpush.bf16.msra.mxu0 0
        %757 = vmatpush.bf16.msra.mxu0 0
        %758 = vmatpush.bf16.msra.mxu0 0
        %759 = vmatpush.bf16.msra.mxu0 0
        %760 = vmatpush.bf16.msra.mxu0 0
        %761 = vmatpush.bf16.msra.mxu0 0
        %762 = vmatpush.bf16.msra.mxu0 %v727
        %763 = vmatmul.bf16.gmra.mxu0 %v739
        %v764 = vpop.f32.mrf.mxu0
        %v765 = vadd.f32 %v751, %v764
        %v766 = vpop.f32.mrf.mxu0
        %v767 = vadd.f32 %v753, %v766
        %768 = vdwg.mxu0
        %v788 = vunpack.c.l.b16 %v608
        %v789 = vunpack.c.l.b16 %v609
        %v790 = vunpack.c.l.b16 %v610
        %v791 = vunpack.c.l.b16 %v611
        %v792 = vunpack.c.l.b16 %v612
        %v793 = vunpack.c.l.b16 %v613
        %v794 = vunpack.c.l.b16 %v614
        %v795 = vunpack.c.l.b16 %v615
        %v796 = vunpack.c.l.b16 %v616
        %v797 = vunpack.c.l.b16 %v617
        %v798 = vunpack.c.l.b16 %v618
        %v799 = vunpack.c.l.b16 %v619
        %v800 = vunpack.c.l.b16 %v620
        %v801 = vunpack.c.l.b16 %v621
        %v802 = vunpack.c.l.b16 %v622
        %v803 = vunpack.c.l.b16 %v623
        %v804 = vunpack.c.l.b16 %v624
        %v805 = vunpack.c.l.b16 %v625
        %v806 = vpack.c.b16 %v789, %v788
        %v807 = vpack.c.b16 %v791, %v790
        %v808 = vpack.c.b16 %v793, %v792
        %v809 = vpack.c.b16 %v795, %v794
        %v810 = vpack.c.b16 %v797, %v796
        %v811 = vpack.c.b16 %v799, %v798
        %v812 = vpack.c.b16 %v801, %v800
        %v813 = vpack.c.b16 %v803, %v802
        %v814 = vpack.c.b16 %v805, %v804
        %v824 = vsel %vm737, %v655, 0
        %826 = vmatpush.bf16.msra.mxu0 %v813
        %827 = vmatpush.bf16.msra.mxu0 %v812
        %828 = vmatpush.bf16.msra.mxu0 %v811
        %829 = vmatpush.bf16.msra.mxu0 %v810
        %830 = vmatpush.bf16.msra.mxu0 %v809
        %831 = vmatpush.bf16.msra.mxu0 %v808
        %832 = vmatpush.bf16.msra.mxu0 %v807
        %833 = vmatpush.bf16.msra.mxu0 %v806
        %834 = vmatmul.bf16.gmra.mxu0 %v654
        %v835 = vpop.f32.mrf.mxu0
        %v836 = vadd.f32 %v765, %v835
        %v837 = vpop.f32.mrf.mxu0
        %v838 = vadd.f32 %v767, %v837
        %839 = vdwg.mxu0
        %840 = vmatpush.bf16.msra.mxu0 0
        %841 = vmatpush.bf16.msra.mxu0 0
        %842 = vmatpush.bf16.msra.mxu0 0
        %843 = vmatpush.bf16.msra.mxu0 0
        %844 = vmatpush.bf16.msra.mxu0 0
        %845 = vmatpush.bf16.msra.mxu0 0
        %846 = vmatpush.bf16.msra.mxu0 0
        %847 = vmatpush.bf16.msra.mxu0 %v814
        %848 = vmatmul.bf16.gmra.mxu0 %v824
        %v849 = vpop.f32.mrf.mxu0
        %v850 = vadd.f32 %v836, %v849
        %v851 = vpop.f32.mrf.mxu0
        %v852 = vadd.f32 %v838, %v851
        %853 = vdwg.mxu0
        %s854 = scalar_lea.vmem %s3, 144
        %v855 = vld [vmem:[%s854] sm:$0xf]
        %v856 = vld [vmem:[%s854 + $0x4] sm:$0xf]
        %v857 = vld [vmem:[%s854 + $0x8] sm:$0xf]
        %v858 = vld [vmem:[%s854 + $0xc] sm:$0xf]
        %v859 = vld [vmem:[%s854 + $0x10] sm:$0xf]
        %v860 = vld [vmem:[%s854 + $0x14] sm:$0xf]
        %v861 = vld [vmem:[%s854 + $0x18] sm:$0xf]
        %v862 = vld [vmem:[%s854 + $0x1c] sm:$0xf]
        %v863 = vld [vmem:[%s854 + $0x20] sm:$0xf]
        %v864 = vld [vmem:[%s854 + $0x24] sm:$0xf]
        %v865 = vld [vmem:[%s854 + $0x28] sm:$0xf]
        %v866 = vld [vmem:[%s854 + $0x2c] sm:$0xf]
        %v867 = vld [vmem:[%s854 + $0x30] sm:$0xf]
        %v868 = vld [vmem:[%s854 + $0x34] sm:$0xf]
        %v869 = vld [vmem:[%s854 + $0x38] sm:$0xf]
        %v870 = vld [vmem:[%s854 + $0x3c] sm:$0xf]
        %v871 = vld [vmem:[%s854 + $0x40] sm:$0xf]
        %v872 = vld [vmem:[%s854 + $0x44] sm:$0xf]
        %v873 = vrot.slane %v654, 1
        %v874 = vrot.slane %v656, 1
        %v875 = vsel %vm466, %v873, %v874
        %v876 = vrot.slane %v655, 1
        %v877 = vrot.slane %v657, 1
        %v878 = vsel %vm466, %v876, %v877
        %v898 = vunpack.c.l.b16 %v855
        %v899 = vunpack.c.l.b16 %v856
        %v900 = vunpack.c.l.b16 %v857
        %v901 = vunpack.c.l.b16 %v858
        %v902 = vunpack.c.l.b16 %v859
        %v903 = vunpack.c.l.b16 %v860
        %v904 = vunpack.c.l.b16 %v861
        %v905 = vunpack.c.l.b16 %v862
        %v906 = vunpack.c.l.b16 %v863
        %v907 = vunpack.c.l.b16 %v864
        %v908 = vunpack.c.l.b16 %v865
        %v909 = vunpack.c.l.b16 %v866
        %v910 = vunpack.c.l.b16 %v867
        %v911 = vunpack.c.l.b16 %v868
        %v912 = vunpack.c.l.b16 %v869
        %v913 = vunpack.c.l.b16 %v870
        %v914 = vunpack.c.l.b16 %v871
        %v915 = vunpack.c.l.b16 %v872
        %v916 = vpack.c.b16 %v899, %v898
        %v917 = vpack.c.b16 %v901, %v900
        %v918 = vpack.c.b16 %v903, %v902
        %v919 = vpack.c.b16 %v905, %v904
        %v920 = vpack.c.b16 %v907, %v906
        %v921 = vpack.c.b16 %v909, %v908
        %v922 = vpack.c.b16 %v911, %v910
        %v923 = vpack.c.b16 %v913, %v912
        %v924 = vpack.c.b16 %v915, %v914
        %v935 = vsel %vm737, %v878, 0
        %937 = vmatpush.bf16.msra.mxu0 %v923
        %938 = vmatpush.bf16.msra.mxu0 %v922
        %939 = vmatpush.bf16.msra.mxu0 %v921
        %940 = vmatpush.bf16.msra.mxu0 %v920
        %941 = vmatpush.bf16.msra.mxu0 %v919
        %942 = vmatpush.bf16.msra.mxu0 %v918
        %943 = vmatpush.bf16.msra.mxu0 %v917
        %944 = vmatpush.bf16.msra.mxu0 %v916
        %945 = vmatmul.bf16.gmra.mxu0 %v875
        %v946 = vpop.f32.mrf.mxu0
        %v947 = vadd.f32 0.0, %v946
        %v948 = vpop.f32.mrf.mxu0
        %v949 = vadd.f32 0.0, %v948
        %950 = vdwg.mxu0
        %951 = vmatpush.bf16.msra.mxu0 0
        %952 = vmatpush.bf16.msra.mxu0 0
        %953 = vmatpush.bf16.msra.mxu0 0
        %954 = vmatpush.bf16.msra.mxu0 0
        %955 = vmatpush.bf16.msra.mxu0 0
        %956 = vmatpush.bf16.msra.mxu0 0
        %957 = vmatpush.bf16.msra.mxu0 0
        %958 = vmatpush.bf16.msra.mxu0 %v924
        %959 = vmatmul.bf16.gmra.mxu0 %v935
        %v960 = vpop.f32.mrf.mxu0
        %v961 = vadd.f32 %v947, %v960
        %v962 = vpop.f32.mrf.mxu0
        %v963 = vadd.f32 %v949, %v962
        %964 = vdwg.mxu0
        %v965 = vadd.f32 %v850, %v961
        %v966 = vadd.f32 %v852, %v963
        %v967 = vld [vmem:[%s4] sm:$0x1]
        %v969 = vperm.slane %v967, 0
        %v971 = vadd.f32 %v965, %v969
        %v972 = vadd.f32 %v966, %v969
        %v973 = vmax.f32 %v971, 0.0
        %v974 = vmax.f32 %v972, 0.0
        %975 = vst [vmem:[%s217] sm:$0xff] %v973
        %976 = vst [vmem:[%s217 + $0x8] sm:$0xff] %v974
        %s977 = sand.u32 %s137, 1
        %s978 = scalar_lea.sflag [#allocation3], %s977
        %s979 = sand.u32 %s137, 1
        %s980 = smul.addr %s979, 16
        %s981 = scalar_lea.vmem [#allocation2], %s980
        // Predicated region
        $region41: #{tpu_custom_call.1} parent=39 // pred_check
          %p982 = pneg %p147
        $region42: #{tpu_custom_call.1} parent=39 // pred_check_branch
          %984 = sbr.rel (%p982) target = $region44
        $region43: #{tpu_custom_call.1} parent=39 // pred_region
          %986 = vsyncadd %s978, 0
          %s987 = smul.addr %s19, 2
          %s988 = smul.addr %s987, 8
          %s989 = scalar_lea.hbm %s5, %s988
          %s990 = sshll.u32 %s981, 4
          %s991 = int_to_ptr.vmem [resolvable:$true] %s990
          %s992 = sshll.u32 %s989, 4
          %s993 = int_to_ptr.hbm [resolvable:$true] %s992
          %998 = dma.vmem_to_hbm [thread:$0]  %s991, 256, %s993, %s978, 128, 128, 8
        $region44: #{tpu_custom_call.1} parent=39 // pred_fallthru
          _
      $region40: #{tpu_custom_call.1} parent=5 // pred_fallthru
        _
      %p999 = scmp.le.s32.totalorder 2, %s14
      // Predicated region
      $region45: #{tpu_custom_call.1} parent=5 // pred_check
        %p1000 = pneg %p999
      $region46: #{tpu_custom_call.1} parent=5 // pred_check_branch
        %1002 = sbr.rel (%p1000) target = $region48
      $region47: #{tpu_custom_call.1} parent=5 // pred_region
        %s1003 = ssub.s32 %s14, 2
        // Predicated region
        $region49: #{tpu_custom_call.1} parent=47 // pred_check
          %p1004 = pneg %p153
        $region50: #{tpu_custom_call.1} parent=47 // pred_check_branch
          %1006 = sbr.rel (%p1004) target = $region52
        $region51: #{tpu_custom_call.1} parent=47 // pred_region
          %s1007 = sand.u32 %s138, 1
          %s1008 = scalar_lea.sflag [#allocation3], %s1007
          %s1009 = sand.u32 %s138, 1
          %s1010 = smul.addr %s1009, 16
          %s1011 = scalar_lea.vmem [#allocation2], %s1010
          %1013 = dma.done %s1008, 256
        $region52: #{tpu_custom_call.1} parent=47 // pred_fallthru
          _
      $region48: #{tpu_custom_call.1} parent=5 // pred_fallthru
        _
    $region6: #{tpu_custom_call.1} parent=1 // loop_footer
      %s18 = sadd.s32 1, %s14
    $region7: #{tpu_custom_call.1} parent=1 // loop_footer_branch
      %13 = sbr.rel target = $region3
    $region8: #{tpu_custom_call.1} parent=1 // loop_exit
      _
    %1014 = vsyncpa [#allocation3], 1
    %s1015 = scalar_lea.sflag [#allocation3], 1
    %1016 = vsyncpa %s1015, 1

</llo_original>
